<compile_context>
chip_gen: v7x
topology: tpu7x:2x2x1
jax: 0.10.0
libtpu: 0.0.40
codegen_flags: <defaults>
</compile_context>

<pallas_src>
import jax
import jax.numpy as jnp
from jax.experimental import pallas as pl
from jax.experimental.pallas import tpu as pltpu


_INV_SQRT2 = 0.7071067811865476
_MIB = 1024 * 1024


def _mlp_kernel(x_ref, w1_ref, b1_ref, w2_ref, b2_ref, o_ref):
    # x_ref : [tm, H]  f32 (cast to bf16 in-kernel)   w1_ref: [H, tn] bf16
    # b1_ref: [1, tn]  f32                            w2_ref: [tn, H] bf16
    # b2_ref: [1, H]   f32
    # o_ref : [tm, H]  f32 — resident across the j (FFN-chunk) axis, doubles as
    #                  the f32 accumulator (no separate scratch).
    j = pl.program_id(1)

    @pl.when(j == 0)
    def _():
        o_ref[...] = jnp.zeros_like(o_ref)

    # fc1 chunk: [tm, H] @ [H, tn] -> [tm, tn]; bf16 MXU operands, f32 accumulation.
    h = jnp.dot(
        x_ref[...].astype(jnp.bfloat16), w1_ref[...],
        preferred_element_type=jnp.float32,
    )
    h = h + b1_ref[...]  # bias in f32

    # Exact (erf) GELU in f32 — matches torch.nn.GELU() default numerics.
    # (tanh approximation would move work to the EUP slot; only worth it if
    #  profiling shows the VALU slot binding, and it changes numerics.)
    h = 0.5 * h * (1.0 + jax.lax.erf(h * _INV_SQRT2))

    # fc2 partial product accumulated directly into the resident output tile.
    o_ref[...] += jnp.dot(
        h.astype(jnp.bfloat16), w2_ref[...], preferred_element_type=jnp.float32
    )

    @pl.when(j == pl.num_programs(1) - 1)
    def _():
        # dropout == identity in eval mode
        o_ref[...] = o_ref[...] + b2_ref[...]


def _vmem_capacity_bytes():
    try:
        return int(pltpu.get_tpu_info().vmem_capacity_bytes)
    except Exception:
        return 64 * _MIB  # conservative default (v7x per-TC VMEM)


def _pick_ffn_tile(h4):
    """Largest tn in {512, 384, 256, 128} that divides the (128-padded) FFN width."""
    h4_pad = ((h4 + 127) // 128) * 128
    for tn in (512, 384, 256, 128):
        if h4_pad % tn == 0:
            return tn, h4_pad
    return 128, h4_pad  # unreachable: h4_pad is a multiple of 128


def _tile_vmem_bytes(tm, tn, h):
    """Per-buffer VMEM accounting for one grid step (inputs/outputs double-buffered)."""
    return int(
        2 * tm * h * 4          # x tile (f32)
        + 2 * tm * h * 4        # out/accumulator tile (f32)
        + 2 * h * tn * 2        # w1 chunk (bf16)
        + 2 * tn * h * 2        # w2 chunk (bf16)
        + 2 * tn * 4 + 2 * h * 4  # biases (f32)
        + tm * tn * 6           # in-body intermediate h (f32 + bf16 copy)
    )


def _pick_row_tile(m, h, tn, vmem_capacity):
    if m < 256:
        # Small / decode shapes: one full-extent row tile (legal block layout).
        return m
    budget = vmem_capacity - 10 * _MIB
    cap = min(1024, ((m + 127) // 128) * 128)
    if vmem_capacity < 96 * _MIB:
        # v7x-class part (64 MiB VMEM, 2 TensorCores): keep >= 2 row tiles so
        # the "parallel" axis actually shards across both cores.
        cap = min(cap, max(128, ((m // 2) // 128) * 128))
    tm = cap
    while tm > 128 and _tile_vmem_bytes(tm, tn, h) > budget:
        tm -= 128
    return max(tm, 128)


@jax.jit
def mlp_forward(x, w1, b1, w2, b2):
    """GPT MLP forward. x: [B, S, H] f32. w1: [H, 4H], w2: [4H, H] (bf16
    preferred, persisted by caller), b1: [1, 4H], b2: [1, H] f32."""
    B, S, H = x.shape
    H4 = w1.shape[1]
    M = B * S

    tn, H4_pad = _pick_ffn_tile(H4)
    vmem_capacity = _vmem_capacity_bytes()
    tm = _pick_row_tile(M, H, tn, vmem_capacity)
    n_row_tiles = pl.cdiv(M, tm)
    grid = (n_row_tiles, H4_pad // tn)

    x2d = x.reshape(M, H)              # stays f32; cast to bf16 inside the kernel
    w1b = w1.astype(jnp.bfloat16)      # no-op when weights are persisted in bf16
    w2b = w2.astype(jnp.bfloat16)
    b1f = b1.reshape(1, H4).astype(jnp.float32)
    b2f = b2.reshape(1, H).astype(jnp.float32)

    if H4_pad != H4:
        # Zero-pad the FFN axis so tn divides it exactly: gelu(0 + 0) = 0 and
        # the corresponding zero rows of w2 contribute nothing to the output.
        pad = H4_pad - H4
        w1b = jnp.pad(w1b, ((0, 0), (0, pad)))
        b1f = jnp.pad(b1f, ((0, 0), (0, pad)))
        w2b = jnp.pad(w2b, ((0, pad), (0, 0)))

    vmem_bytes = _tile_vmem_bytes(tm, tn, H)
    vmem_limit = int(
        min(vmem_capacity - 8 * _MIB, max(32 * _MIB, vmem_bytes + 4 * _MIB))
    )

    cost = pl.CostEstimate(
        flops=4 * M * H * H4_pad,        # two matmuls, 2 flops per MAC
        transcendentals=M * H4_pad,      # erf
        bytes_accessed=int(
            M * H * 4                                        # x read (f32)
            + n_row_tiles * (H * H4_pad + H4_pad * H) * 2    # weight re-stream (bf16)
            + n_row_tiles * (H4_pad + H) * 4                 # bias re-stream (f32)
            + M * H * 4                                      # output write (f32)
        ),
    )

    out2d = pl.pallas_call(
        _mlp_kernel,
        out_shape=jax.ShapeDtypeStruct((M, H), jnp.float32),
        grid_spec=pltpu.PrefetchScalarGridSpec(
            num_scalar_prefetch=0,
            grid=grid,
            in_specs=[
                pl.BlockSpec((tm, H), lambda i, j: (i, 0)),   # x rows (reused over j)
                # If DMA is still exposed on 128-MiB parts after raising tm, a
                # third weight buffer (pipeline_mode=pl.Buffered(3)) can hide
                # DMA-issue jitter; left at the default depth here.
                pl.BlockSpec((H, tn), lambda i, j: (0, j)),   # w1 chunk
                pl.BlockSpec((1, tn), lambda i, j: (0, j)),   # b1 chunk
                pl.BlockSpec((tn, H), lambda i, j: (j, 0)),   # w2 chunk
                pl.BlockSpec((1, H), lambda i, j: (0, 0)),    # b2
            ],
            out_specs=pl.BlockSpec((tm, H), lambda i, j: (i, 0)),  # resident over j
        ),
        compiler_params=pltpu.CompilerParams(
            dimension_semantics=("parallel", "arbitrary"),
            vmem_limit_bytes=vmem_limit,
        ),
        cost_estimate=cost,
    )(x2d, w1b, b1f, w2b, b2f)

    return out2d.reshape(B, S, H).astype(x.dtype)


def init_params(key, hidden_size):
    """Deterministic nn.Linear-style init (uniform +/- 1/sqrt(fan_in))."""
    h, h4 = hidden_size, 4 * hidden_size
    k1, k2, k3, k4 = jax.random.split(key, 4)
    lim1 = 1.0 / jnp.sqrt(h)
    lim2 = 1.0 / jnp.sqrt(h4)
    # stored as [in, out] = transpose of torch's [out, in]
    w1 = jax.random.uniform(k1, (h, h4), jnp.float32, -lim1, lim1)
    b1 = jax.random.uniform(k2, (1, h4), jnp.float32, -lim1, lim1)
    w2 = jax.random.uniform(k3, (h4, h), jnp.float32, -lim2, lim2)
    b2 = jax.random.uniform(k4, (1, h), jnp.float32, -lim2, lim2)
    return w1, b1, w2, b2


if __name__ == "__main__":
    # Small shapes consistent with the module: batch=2, seq=8, hidden=32.
    B, S, H = 2, 8, 32
    key = jax.random.PRNGKey(0)
    kx, kp = jax.random.split(key)

    x = jax.random.normal(kx, (B, S, H), jnp.float32)
    w1f, b1, w2f, b2 = init_params(kp, H)
    # Persist matmul weights in bf16 once (native MXU dtype): no per-call casts.
    w1 = w1f.astype(jnp.bfloat16)
    w2 = w2f.astype(jnp.bfloat16)

    y = mlp_forward(x, w1, b1, w2, b2)
    jax.block_until_ready(y)

    # sanity check vs. plain-JAX reference (same bf16 operand rounding as kernel)
    xb = x.reshape(-1, H).astype(jnp.bfloat16).astype(jnp.float32)
    w1r = w1.astype(jnp.float32)
    w2r = w2.astype(jnp.float32)
    h_ref = xb @ w1r + b1
    h_ref = 0.5 * h_ref * (1.0 + jax.lax.erf(h_ref * _INV_SQRT2))
    h_ref = h_ref.astype(jnp.bfloat16).astype(jnp.float32)
    y_ref = (h_ref @ w2r + b2).reshape(B, S, H)
    assert jnp.allclose(y, y_ref, atol=1e-2, rtol=1e-2), (
        float(jnp.max(jnp.abs(y - y_ref)))
    )

    print("KERNEL_OK")
</pallas_src>

<mosaic_0001>
module attributes {stable_mosaic.version = 11 : i64} {
  func.func @_mlp_kernel(%arg0: i32, %arg1: i32, %arg2: memref<16x32xf32, #tpu.memory_space<vmem>>, %arg3: memref<32x128xbf16, #tpu.memory_space<vmem>>, %arg4: memref<1x128xf32, #tpu.memory_space<vmem>>, %arg5: memref<128x32xbf16, #tpu.memory_space<vmem>>, %arg6: memref<1x32xf32, #tpu.memory_space<vmem>>, %arg7: memref<16x32xf32, #tpu.memory_space<vmem>>) attributes {dimension_semantics = [#tpu.dimension_semantics<parallel>, #tpu.dimension_semantics<arbitrary>], iteration_bounds = array<i64: 1, 1>, scalar_prefetch = 0 : i64, scratch_operands = 0 : i64, tpu.core_type = #tpu.core_type<tc>, window_params = [{transform_indices = @transform_0, window_bounds = array<i64: 16, 32>}, {transform_indices = @transform_1, window_bounds = array<i64: 32, 128>}, {transform_indices = @transform_2, window_bounds = array<i64: 1, 128>}, {transform_indices = @transform_3, window_bounds = array<i64: 128, 32>}, {pipeline_mode = #tpu.pipeline_mode<synchronous>, transform_indices = @transform_4, window_bounds = array<i64: 1, 32>}, {transform_indices = @transform_5, window_bounds = array<i64: 16, 32>}]} {
    %c0_i32 = arith.constant 0 : i32
    %0 = arith.cmpi eq, %arg1, %c0_i32 : i32
    %1 = arith.extui %0 : i1 to i32
    %c0_i32_0 = arith.constant 0 : i32
    %2 = arith.cmpi ne, %1, %c0_i32_0 : i32
    scf.if %2 {
      %cst_18 = arith.constant 0.000000e+00 : f32
      %27 = vector.broadcast %cst_18 : f32 to vector<16x32xf32>
      %c0_19 = arith.constant 0 : index
      %c0_20 = arith.constant 0 : index
      %28 = vector.load %arg7[%c0_19, %c0_20] : memref<16x32xf32, #tpu.memory_space<vmem>>, vector<16x32xf32>
      tpu.vector_store %arg7[%c0_19, %c0_20], %27 {strides = array<i32>} : memref<16x32xf32, #tpu.memory_space<vmem>>, vector<16x32xf32>,
    } else {
    }
    %c0 = arith.constant 0 : index
    %c0_1 = arith.constant 0 : index
    %3 = vector.load %arg2[%c0, %c0_1] : memref<16x32xf32, #tpu.memory_space<vmem>>, vector<16x32xf32>
    %4 = arith.truncf %3 : vector<16x32xf32> to vector<16x32xbf16>
    %c0_2 = arith.constant 0 : index
    %c0_3 = arith.constant 0 : index
    %5 = vector.load %arg3[%c0_2, %c0_3] : memref<32x128xbf16, #tpu.memory_space<vmem>>, vector<32x128xbf16>
    %cst = arith.constant dense<0.000000e+00> : vector<16x128xf32>
    %6 = tpu.matmul %4, %5, %cst {dimension_numbers = #tpu.dot_dimension_numbers<[1], [0], [0], [1], [0, 0, 1, 1], [], []>} : vector<16x32xbf16>, vector<32x128xbf16>, vector<16x128xf32> -> vector<16x128xf32>
    %c0_4 = arith.constant 0 : index
    %c0_5 = arith.constant 0 : index
    %7 = vector.load %arg4[%c0_4, %c0_5] : memref<1x128xf32, #tpu.memory_space<vmem>>, vector<1x128xf32>
    %8 = vector.broadcast %7 : vector<1x128xf32> to vector<16x128xf32>
    %9 = arith.addf %6, %8 : vector<16x128xf32>
    %cst_6 = arith.constant 5.000000e-01 : f32
    %10 = vector.broadcast %cst_6 : f32 to vector<16x128xf32>
    %11 = arith.mulf %10, %9 : vector<16x128xf32>
    %cst_7 = arith.constant 0.707106769 : f32
    %12 = vector.broadcast %cst_7 : f32 to vector<16x128xf32>
    %13 = arith.mulf %9, %12 : vector<16x128xf32>
    %14 = math.erf %13 : vector<16x128xf32>
    %cst_8 = arith.constant 1.000000e+00 : f32
    %15 = vector.broadcast %cst_8 : f32 to vector<16x128xf32>
    %16 = arith.addf %15, %14 : vector<16x128xf32>
    %17 = arith.mulf %11, %16 : vector<16x128xf32>
    %c0_9 = arith.constant 0 : index
    %c0_10 = arith.constant 0 : index
    %18 = vector.load %arg7[%c0_9, %c0_10] : memref<16x32xf32, #tpu.memory_space<vmem>>, vector<16x32xf32>
    %19 = arith.truncf %17 : vector<16x128xf32> to vector<16x128xbf16>
    %c0_11 = arith.constant 0 : index
    %c0_12 = arith.constant 0 : index
    %20 = vector.load %arg5[%c0_11, %c0_12] : memref<128x32xbf16, #tpu.memory_space<vmem>>, vector<128x32xbf16>
    %cst_13 = arith.constant dense<0.000000e+00> : vector<16x32xf32>
    %21 = tpu.matmul %19, %20, %cst_13 {dimension_numbers = #tpu.dot_dimension_numbers<[1], [0], [0], [1], [0, 0, 1, 1], [], []>} : vector<16x128xbf16>, vector<128x32xbf16>, vector<16x32xf32> -> vector<16x32xf32>
    %22 = arith.addf %18, %21 : vector<16x32xf32>
    %c0_14 = arith.constant 0 : index
    %c0_15 = arith.constant 0 : index
    %23 = vector.load %arg7[%c0_14, %c0_15] : memref<16x32xf32, #tpu.memory_space<vmem>>, vector<16x32xf32>
    tpu.vector_store %arg7[%c0_14, %c0_15], %22 {strides = array<i32>} : memref<16x32xf32, #tpu.memory_space<vmem>>, vector<16x32xf32>,
    %c0_i32_16 = arith.constant 0 : i32
    %24 = arith.cmpi eq, %arg1, %c0_i32_16 : i32
    %25 = arith.extui %24 : i1 to i32
    %c0_i32_17 = arith.constant 0 : i32
    %26 = arith.cmpi ne, %25, %c0_i32_17 : i32
    scf.if %26 {
      %c0_18 = arith.constant 0 : index
      %c0_19 = arith.constant 0 : index
      %27 = vector.load %arg7[%c0_18, %c0_19] : memref<16x32xf32, #tpu.memory_space<vmem>>, vector<16x32xf32>
      %c0_20 = arith.constant 0 : index
      %c0_21 = arith.constant 0 : index
      %28 = vector.load %arg6[%c0_20, %c0_21] : memref<1x32xf32, #tpu.memory_space<vmem>>, vector<1x32xf32>
      %29 = vector.broadcast %28 : vector<1x32xf32> to vector<16x32xf32>
      %30 = arith.addf %27, %29 : vector<16x32xf32>
      %c0_22 = arith.constant 0 : index
      %c0_23 = arith.constant 0 : index
      %31 = vector.load %arg7[%c0_22, %c0_23] : memref<16x32xf32, #tpu.memory_space<vmem>>, vector<16x32xf32>
      tpu.vector_store %arg7[%c0_22, %c0_23], %30 {strides = array<i32>} : memref<16x32xf32, #tpu.memory_space<vmem>>, vector<16x32xf32>,
    } else {
    }
    return
  }
  func.func @transform_0(%arg0: i32, %arg1: i32) -> (i32, i32) {
    %c0_i32 = arith.constant 0 : i32
    %c0_i32_0 = arith.constant 0 : i32
    return %arg0, %c0_i32 : i32, i32
  }
  func.func @transform_1(%arg0: i32, %arg1: i32) -> (i32, i32) {
    %c0_i32 = arith.constant 0 : i32
    %c0_i32_0 = arith.constant 0 : i32
    return %c0_i32, %arg1 : i32, i32
  }
  func.func @transform_2(%arg0: i32, %arg1: i32) -> (i32, i32) {
    %c0_i32 = arith.constant 0 : i32
    %c0_i32_0 = arith.constant 0 : i32
    return %c0_i32, %arg1 : i32, i32
  }
  func.func @transform_3(%arg0: i32, %arg1: i32) -> (i32, i32) {
    %c0_i32 = arith.constant 0 : i32
    %c0_i32_0 = arith.constant 0 : i32
    return %arg1, %c0_i32 : i32, i32
  }
  func.func @transform_4(%arg0: i32, %arg1: i32) -> (i32, i32) {
    %c0_i32 = arith.constant 0 : i32
    %c0_i32_0 = arith.constant 0 : i32
    %c0_i32_1 = arith.constant 0 : i32
    return %c0_i32, %c0_i32_0 : i32, i32
  }
  func.func @transform_5(%arg0: i32, %arg1: i32) -> (i32, i32) {
    %c0_i32 = arith.constant 0 : i32
    %c0_i32_0 = arith.constant 0 : i32
    return %arg0, %c0_i32 : i32, i32
  }
}

</mosaic_0001>

<llo_original>
// kernel: mlp_forward.1
$region0: #{mlp_forward.1}
  #allocation0 [shape = 'u32[]', space=smem, size = 0x4, offset = 0x4, fixed_abs, tag = 'smem constant byte address 0x4 - core index']
  #allocation1 [shape = 'u32[144,128]{1,0:T(1,128)}', space=vmem, size = 0x12000, scoped, tag = 'internal scratch']
  %s0 = inlined_call_operand.vmem [shape: f32[16,32], index: 0, kind: input, shape index: {}]
  %s1 = inlined_call_operand.vmem [shape: bf16[32,128], index: 1, kind: input, shape index: {}]
  %s2 = inlined_call_operand.vmem [shape: f32[1,128], index: 2, kind: input, shape index: {}]
  %s3 = inlined_call_operand.vmem [shape: bf16[128,32], index: 3, kind: input, shape index: {}]
  %s4 = inlined_call_operand.vmem [shape: f32[1,32], index: 4, kind: input, shape index: {}]
  %s5 = inlined_call_operand.hbm [shape: f32[16,32], index: 5, kind: output, shape index: {}]
  %s6 = sld [smem:[#allocation0]]
  $region38: #{mlp_forward.1} parent=0
    _
  %s8 = ssub.s32 1, %s6
  %s9 = scalar_select 0, %s8, %s6
  $region1: #{mlp_forward.1} parent=0
    #allocation2 [shape = 'u8[8192]{0}', space=vmem, size = 0x2000, scoped, tag = 'output window, operand 0, single buffered']
    #allocation3 [shape = 's32[1]{0}', space=sflag, size = 0x4, scoped, tag = 'scoped memory for mlp_forward.1']
    %10 = vsyncpa [#allocation3], 0
    // Predicated region
    $region2: #{mlp_forward.1} parent=1 // pred_check
      _
    $region3: #{mlp_forward.1} parent=1 // pred_check_branch
      %12 = sbr.rel (0) target = $region5
    $region4: #{mlp_forward.1} parent=1 // pred_region
      _
    $region5: #{mlp_forward.1} parent=1 // pred_fallthru
      _
    // Predicated region
    $region6: #{mlp_forward.1} parent=1 // pred_check
      _
    $region7: #{mlp_forward.1} parent=1 // pred_check_branch
      %14 = sbr.rel (0) target = $region9
    $region8: #{mlp_forward.1} parent=1 // pred_region
      _
    $region9: #{mlp_forward.1} parent=1 // pred_fallthru
      _
    // Predicated region
    $region10: #{mlp_forward.1} parent=1 // pred_check
      _
    $region11: #{mlp_forward.1} parent=1 // pred_check_branch
      %16 = sbr.rel (0) target = $region13
    $region12: #{mlp_forward.1} parent=1 // pred_region
      _
    $region13: #{mlp_forward.1} parent=1 // pred_fallthru
      _
    // Predicated region
    $region14: #{mlp_forward.1} parent=1 // pred_check
      _
    $region15: #{mlp_forward.1} parent=1 // pred_check_branch
      %18 = sbr.rel (0) target = $region17
    $region16: #{mlp_forward.1} parent=1 // pred_region
      _
    $region17: #{mlp_forward.1} parent=1 // pred_fallthru
      _
    // Predicated region
    $region18: #{mlp_forward.1} parent=1 // pred_check
      _
    $region19: #{mlp_forward.1} parent=1 // pred_check_branch
      %20 = sbr.rel (0) target = $region21
    $region20: #{mlp_forward.1} parent=1 // pred_region
      _
    $region21: #{mlp_forward.1} parent=1 // pred_fallthru
      _
    %p22 = scmp.eq.s32.totalorder 0, 0
    // Predicated region
    $region22: #{mlp_forward.1} parent=1 // pred_check
      %p23 = pneg %p22
    $region23: #{mlp_forward.1} parent=1 // pred_check_branch
      %25 = sbr.rel (%p23) target = $region25
    $region24: #{mlp_forward.1} parent=1 // pred_region
      %vm26 = vcmask 261120
      %27 = vst.msk [vmem:[#allocation2] sm:$0xff] %vm26, 0.0
      %28 = vst.msk [vmem:[#allocation2 + $0x8] sm:$0xff] %vm26, 0.0
    $region25: #{mlp_forward.1} parent=1 // pred_fallthru
      _
    %v29 = vld [vmem:[%s0] sm:$0xff]
    %v30 = vld [vmem:[%s0 + $0x8] sm:$0xff]
    %v31 = vpack.c.bf16 %v30, %v29
    %v32 = vld [vmem:[%s1] sm:$0xf]
    %v33 = vld [vmem:[%s1 + $0x4] sm:$0xf]
    %v34 = vld [vmem:[%s1 + $0x8] sm:$0xf]
    %v35 = vld [vmem:[%s1 + $0xc] sm:$0xf]
    %v36 = vld [vmem:[%s2] sm:$0x1]
    %v38 = vlaneseq
    %v39 = vshrl.u32 %v38, 7
    %v40 = vsub.s32 0, %v39
    %v41 = vrot.slane %v36, %v40
    %v47 = vunpack.c.l.b16 %v32
    %v48 = vunpack.c.l.b16 %v33
    %v49 = vunpack.c.l.b16 %v34
    %v50 = vunpack.c.l.b16 %v35
    %v51 = vpack.c.b16 %v48, %v47
    %v52 = vpack.c.b16 %v50, %v49
    %vm55 = vcmask 261120
    %v57 = vsel %vm55, %v31, 0
    %59 = vmatprep.subr.bf16.mxu0 0
    %60 = vmatpush1.bf16.msra.mxu0 %v51
    %61 = vmatprep.subr.bf16.mxu0 0
    %62 = vmatpush1.bf16.msra.mxu0 %v52
    %63 = vmatprep.subr.bf16.mxu0 0
    %64 = vmatpush1.bf16.msra.mxu0 0
    %65 = vmatprep.subr.bf16.mxu0 0
    %66 = vmatpush1.bf16.msra.mxu0 0
    %67 = vmatprep.subr.bf16.mxu0 0
    %68 = vmatpush1.bf16.msra.mxu0 0
    %69 = vmatprep.subr.bf16.mxu0 0
    %70 = vmatpush1.bf16.msra.mxu0 0
    %71 = vmatprep.subr.bf16.mxu0 0
    %72 = vmatpush1.bf16.msra.mxu0 0
    %73 = vmatprep.subr.bf16.mxu0 0
    %74 = vmatpush1.bf16.msra.mxu0 0
    %75 = vmatprep.subr.bf16.mxu0 0
    %76 = vmatpush1.bf16.msra.mxu0 0
    %77 = vmatprep.subr.bf16.mxu0 0
    %78 = vmatpush1.bf16.msra.mxu0 0
    %79 = vmatprep.subr.bf16.mxu0 0
    %80 = vmatpush1.bf16.msra.mxu0 0
    %81 = vmatprep.subr.bf16.mxu0 0
    %82 = vmatpush1.bf16.msra.mxu0 0
    %83 = vmatprep.subr.bf16.mxu0 0
    %84 = vmatpush1.bf16.msra.mxu0 0
    %85 = vmatprep.subr.bf16.mxu0 0
    %86 = vmatpush1.bf16.msra.mxu0 0
    %87 = vmatprep.subr.bf16.mxu0 0
    %88 = vmatpush1.bf16.msra.mxu0 0
    %89 = vmatprep.subr.bf16.mxu0 0
    %90 = vmatpush1.bf16.msra.mxu0 0
    %91 = vmatprep.mubr.bf16.mxu0 0
    %92 = vmatmul.mubr.bf16.gmra.mrb[0].mxu0 %v57
    %v93 = vpop.f32.mrb[0].mxu0
    %v94 = vadd.f32 %v41, %v93
    %v95 = vpop.f32.mrb[0].mxu0
    %v96 = vpop.f32.mrb[0].mxu0
    %v97 = vadd.f32 %v41, %v96
    %v98 = vpop.f32.mrb[0].mxu0
    %99 = vdwg.mxu0
    %v100 = vmul.f32 %v94, 0.5
    %v101 = vmul.f32 %v97, 0.5
    %v102 = vmul.f32 %v94, 0.70710677
    %v103 = vmul.f32 %v97, 0.70710677
    %v104 = verf.f32.pop %v102
    %v105 = verf.f32.pop %v103
    %v106 = vadd.f32 %v104, 1.0
    %v107 = vadd.f32 %v105, 1.0
    %v108 = vmul.f32 %v100, %v106
    %v109 = vmul.f32 %v101, %v107
    %v110 = vld [vmem:[#allocation2] sm:$0xff]
    %v111 = vld [vmem:[#allocation2 + $0x8] sm:$0xff]
    %v112 = vpack.c.bf16 %v109, %v108
    %v113 = vld [vmem:[%s3] sm:$0xf]
    %v114 = vld [vmem:[%s3 + $0x4] sm:$0xf]
    %v115 = vld [vmem:[%s3 + $0x8] sm:$0xf]
    %v116 = vld [vmem:[%s3 + $0xc] sm:$0xf]
    %v117 = vld [vmem:[%s3 + $0x10] sm:$0xf]
    %v118 = vld [vmem:[%s3 + $0x14] sm:$0xf]
    %v119 = vld [vmem:[%s3 + $0x18] sm:$0xf]
    %v120 = vld [vmem:[%s3 + $0x1c] sm:$0xf]
    %v121 = vld [vmem:[%s3 + $0x20] sm:$0xf]
    %v122 = vld [vmem:[%s3 + $0x24] sm:$0xf]
    %v123 = vld [vmem:[%s3 + $0x28] sm:$0xf]
    %v124 = vld [vmem:[%s3 + $0x2c] sm:$0xf]
    %v125 = vld [vmem:[%s3 + $0x30] sm:$0xf]
    %v126 = vld [vmem:[%s3 + $0x34] sm:$0xf]
    %v127 = vld [vmem:[%s3 + $0x38] sm:$0xf]
    %v128 = vld [vmem:[%s3 + $0x3c] sm:$0xf]
    %v145 = vunpack.c.l.b16 %v113
    %v146 = vunpack.c.l.b16 %v114
    %v147 = vunpack.c.l.b16 %v115
    %v148 = vunpack.c.l.b16 %v116
    %v149 = vunpack.c.l.b16 %v117
    %v150 = vunpack.c.l.b16 %v118
    %v151 = vunpack.c.l.b16 %v119
    %v152 = vunpack.c.l.b16 %v120
    %v153 = vunpack.c.l.b16 %v121
    %v154 = vunpack.c.l.b16 %v122
    %v155 = vunpack.c.l.b16 %v123
    %v156 = vunpack.c.l.b16 %v124
    %v157 = vunpack.c.l.b16 %v125
    %v158 = vunpack.c.l.b16 %v126
    %v159 = vunpack.c.l.b16 %v127
    %v160 = vunpack.c.l.b16 %v128
    %v161 = vpack.c.b16 %v146, %v145
    %v162 = vpack.c.b16 %v148, %v147
    %v163 = vpack.c.b16 %v150, %v149
    %v164 = vpack.c.b16 %v152, %v151
    %v165 = vpack.c.b16 %v154, %v153
    %v166 = vpack.c.b16 %v156, %v155
    %v167 = vpack.c.b16 %v158, %v157
    %v168 = vpack.c.b16 %v160, %v159
    %177 = vmatprep.subr.bf16.mxu0 0
    %178 = vmatpush1.bf16.msra.mxu0 %v161
    %179 = vmatprep.subr.bf16.mxu0 0
    %180 = vmatpush1.bf16.msra.mxu0 %v162
    %181 = vmatprep.subr.bf16.mxu0 0
    %182 = vmatpush1.bf16.msra.mxu0 %v163
    %183 = vmatprep.subr.bf16.mxu0 0
    %184 = vmatpush1.bf16.msra.mxu0 %v164
    %185 = vmatprep.subr.bf16.mxu0 0
    %186 = vmatpush1.bf16.msra.mxu0 %v165
    %187 = vmatprep.subr.bf16.mxu0 0
    %188 = vmatpush1.bf16.msra.mxu0 %v166
    %189 = vmatprep.subr.bf16.mxu0 0
    %190 = vmatpush1.bf16.msra.mxu0 %v167
    %191 = vmatprep.subr.bf16.mxu0 0
    %192 = vmatpush1.bf16.msra.mxu0 %v168
    %193 = vmatprep.subr.bf16.mxu0 0
    %194 = vmatpush1.bf16.msra.mxu0 0
    %195 = vmatprep.subr.bf16.mxu0 0
    %196 = vmatpush1.bf16.msra.mxu0 0
    %197 = vmatprep.subr.bf16.mxu0 0
    %198 = vmatpush1.bf16.msra.mxu0 0
    %199 = vmatprep.subr.bf16.mxu0 0
    %200 = vmatpush1.bf16.msra.mxu0 0
    %201 = vmatprep.subr.bf16.mxu0 0
    %202 = vmatpush1.bf16.msra.mxu0 0
    %203 = vmatprep.subr.bf16.mxu0 0
    %204 = vmatpush1.bf16.msra.mxu0 0
    %205 = vmatprep.subr.bf16.mxu0 0
    %206 = vmatpush1.bf16.msra.mxu0 0
    %207 = vmatprep.subr.bf16.mxu0 0
    %208 = vmatpush1.bf16.msra.mxu0 0
    %209 = vmatprep.mubr.bf16.mxu0 0
    %210 = vmatmul.mubr.bf16.gmra.mrb[0].mxu0 %v112
    %v211 = vpop.f32.mrb[0].mxu0
    %v212 = vadd.f32 0.0, %v211
    %v213 = vpop.f32.mrb[0].mxu0
    %v214 = vpop.f32.mrb[0].mxu0
    %v215 = vadd.f32 0.0, %v214
    %v216 = vpop.f32.mrb[0].mxu0
    %217 = vdwg.mxu0
    %v218 = vadd.f32 %v110, %v212
    %v219 = vadd.f32 %v111, %v215
    %220 = vst.msk [vmem:[#allocation2] sm:$0xff] %vm55, %v218
    %221 = vst.msk [vmem:[#allocation2 + $0x8] sm:$0xff] %vm55, %v219
    // Predicated region
    $region26: #{mlp_forward.1} parent=1 // pred_check
      %p222 = pneg %p22
    $region27: #{mlp_forward.1} parent=1 // pred_check_branch
      %224 = sbr.rel (%p222) target = $region29
    $region28: #{mlp_forward.1} parent=1 // pred_region
      %v225 = vld [vmem:[#allocation2] sm:$0xff]
      %v226 = vld [vmem:[#allocation2 + $0x8] sm:$0xff]
      %v227 = vld [vmem:[%s4] sm:$0x1]
      %v229 = vlaneseq
      %v230 = vshrl.u32 %v229, 7
      %v231 = vsub.s32 0, %v230
      %v232 = vrot.slane %v227, %v231
      %v234 = vadd.f32 %v225, %v232
      %v235 = vadd.f32 %v226, %v232
      %236 = vst.msk [vmem:[#allocation2] sm:$0xff] %vm55, %v234
      %237 = vst.msk [vmem:[#allocation2 + $0x8] sm:$0xff] %vm55, %v235
    $region29: #{mlp_forward.1} parent=1 // pred_fallthru
      _
    // Predicated region
    $region30: #{mlp_forward.1} parent=1 // pred_check
      _
    $region31: #{mlp_forward.1} parent=1 // pred_check_branch
      %239 = sbr.rel (0) target = $region33
    $region32: #{mlp_forward.1} parent=1 // pred_region
      %s241 = ssub.s32 256, 256
      %242 = vsyncadd [#allocation3], %s241
      %s243 = sshll.u32 [#allocation2], 4
      %s244 = int_to_ptr.vmem [resolvable:$true] %s243
      %249 = dma.vmem_to_hbm [thread:$0]  %s244, 256, %s5, [#allocation3], 128, 128, 8
    $region33: #{mlp_forward.1} parent=1 // pred_fallthru
      _
    // Predicated region
    $region34: #{mlp_forward.1} parent=1 // pred_check
      _
    $region35: #{mlp_forward.1} parent=1 // pred_check_branch
      %251 = sbr.rel (0) target = $region37
    $region36: #{mlp_forward.1} parent=1 // pred_region
      %252 = dma.done [#allocation3], 256
    $region37: #{mlp_forward.1} parent=1 // pred_fallthru
      _
    %253 = vsyncpa [#allocation3], 1

</llo_original>
